<compile_context>
chip_gen: v5e
topology: v5e:2x2
jax: 0.10.0
libtpu: 0.0.40
codegen_flags: <defaults>
</compile_context>

<pallas_src>
import functools

import jax
import jax.numpy as jnp
from jax import lax
from jax.experimental import pallas as pl
from jax.experimental.pallas import tpu as pltpu


# ----------------------------------------------------------------------------
# kernel helpers
# ----------------------------------------------------------------------------
def _dilate_1d(diff, idx, window_size, S):
    """boundaries[j] = max_{k in [-w, w]} diff[j+k]  (out-of-range -> 0).

    Log-step doubling per direction; wrap-around is masked at every step so
    the max composes correctly (neutral element 0).
    """
    # right-looking: r[j] = max_{k=0..w} diff[j+k]
    right = diff
    cover = 0
    while cover < window_size:
        s = min(cover + 1, window_size - cover)
        rolled = pltpu.roll(right, shift=(-s) % S, axis=1)   # rolled[j] = right[j+s]
        rolled = jnp.where(idx < S - s, rolled, 0.0)
        right = jnp.maximum(right, rolled)
        cover += s
    # left-looking: l[j] = max_{k=0..w} diff[j-k]
    left = diff
    cover = 0
    while cover < window_size:
        s = min(cover + 1, window_size - cover)
        rolled = pltpu.roll(left, shift=s, axis=1)           # rolled[j] = left[j-s]
        rolled = jnp.where(idx >= s, rolled, 0.0)
        left = jnp.maximum(left, rolled)
        cover += s
    return jnp.maximum(right, left)


def _boundary_focal_kernel(*refs, alpha, gamma, boundary_weight, window_size,
                           label_smoothing, has_mask, chunk_rows, tile_rows,
                           batch_rows, ragged):
    if has_mask:
        x_ref, t_ref, m_ref, loss_ref, msum_ref = refs
    else:
        x_ref, t_ref, loss_ref = refs
        m_ref = msum_ref = None

    S = x_ref.shape[1]
    n_chunks = tile_rows // chunk_rows

    # hoisted loop-invariant constants (JAX does not CSE broadcast_in_dim)
    idx = lax.broadcasted_iota(jnp.int32, (1, S), 1)           # lane index
    if ragged:
        rows_left = jnp.int32(batch_rows) - pl.program_id(0) * jnp.int32(tile_rows)
        row_iota = lax.broadcasted_iota(jnp.int32, (chunk_rows, 1), 0)

    ls_half = jnp.float32(label_smoothing * 0.5)
    ls_scale = jnp.float32(1.0 - label_smoothing)
    a_base = jnp.float32(1.0 - alpha)
    a_slope = jnp.float32(2.0 * alpha - 1.0)
    bw_m1 = jnp.float32(boundary_weight - 1.0)

    def chunk(c, carry):
        r0 = pl.multiple_of(c * chunk_rows, chunk_rows)
        x = x_ref[pl.ds(r0, chunk_rows), :]                      # (CB, S) f32
        t = t_ref[pl.ds(r0, chunk_rows), :].astype(jnp.float32)  # bf16 -> f32

        # label smoothing / alpha weight (binary t -> pure arithmetic, no selects)
        st = ls_half + t * ls_scale
        alpha_w = a_base + t * a_slope

        # transition detection: diff[j] = 1 iff t[j] != t[j-1], j >= 1
        prev = pltpu.roll(t, shift=1, axis=1)                    # prev[j] = t[j-1]
        diff = jnp.where((t != prev) & (idx >= 1), 1.0, 0.0)

        # dilate transitions over [i-w, i+w] and build boundary weights
        boundaries = _dilate_1d(diff, idx, window_size, S)
        weights = 1.0 + boundaries * bw_m1

        # adaptive confidence (torch.no_grad block): |sigmoid(x)-0.5|*2 == tanh(|x|/2)
        ax = jnp.abs(x)
        conf = jnp.tanh(0.5 * ax)
        weights = weights * (1.0 - 0.5 * conf)

        # stable BCE-with-logits (PyTorch formula); pt via
        # exp(-bce) == exp(x*st - relu(x)) * sigmoid(|x|), sigmoid(|x|) == (1+conf)/2
        relu_x = jnp.maximum(x, 0.0)
        xst = x * st
        e = jnp.exp(-ax)
        bce = relu_x - xst + jnp.log1p(e)
        inv = 0.5 * (1.0 + conf)
        pt = jnp.exp(xst - relu_x) * inv
        one_m_pt = 1.0 - pt
        if float(gamma) == 2.0:
            focal = one_m_pt * one_m_pt
        else:
            focal = jnp.power(jnp.maximum(one_m_pt, 1e-12), gamma)

        f_loss = alpha_w * focal * bce * weights

        if ragged:
            valid = (row_iota + r0) < rows_left                  # (CB, 1) bool

        if has_mask:
            m = m_ref[pl.ds(r0, chunk_rows), :].astype(jnp.float32)
            if ragged:
                m = jnp.where(valid, m, 0.0)
            f_loss = f_loss * m
            if ragged:
                f_loss = jnp.where(valid, f_loss, 0.0)
            loss_acc, m_acc = carry
            return (loss_acc + jnp.sum(f_loss, axis=0, keepdims=True),
                    m_acc + jnp.sum(m, axis=0, keepdims=True))
        else:
            if ragged:
                f_loss = jnp.where(valid, f_loss, 0.0)
            return carry + jnp.sum(f_loss, axis=0, keepdims=True)

    zero = jnp.zeros((1, S), jnp.float32)
    if has_mask:
        loss_acc, m_acc = lax.fori_loop(0, n_chunks, chunk, (zero, zero))
        loss_ref[...] = loss_acc
        msum_ref[...] = m_acc
    else:
        loss_ref[...] = lax.fori_loop(0, n_chunks, chunk, zero)


# ----------------------------------------------------------------------------
# wrapper: generation-aware tiling
# ----------------------------------------------------------------------------
def _vmem_plan():
    """(f32 input-tile budget bytes, vmem_limit_bytes) for the current chip."""
    try:
        cap = int(getattr(pltpu.get_tpu_info(), "vmem_capacity_bytes",
                          128 * 1024 * 1024))
    except Exception:
        cap = 128 * 1024 * 1024
    if cap <= 80 * 1024 * 1024:            # v7x-class: 64 MiB per TensorCore
        return 4 * 1024 * 1024, 48 * 1024 * 1024
    return 8 * 1024 * 1024, 96 * 1024 * 1024  # v5e / v6e: 128 MiB physical


def _pick_tile(B, S, tile_budget_bytes):
    """Batch-tile rows: multiple of 16 (bf16 sublane tiling) within the budget."""
    tb = max(16, (tile_budget_bytes // (4 * max(S, 1))) // 16 * 16)
    if B <= tb:
        if B >= 32:
            # split in two so v7x's second TensorCore gets work
            tb = max(16, ((B + 1) // 2 + 15) // 16 * 16)
        else:
            tb = B                       # full-dim block (always legal)
    else:
        # prefer a tile that divides B exactly (no ragged last tile), but only
        # if it costs at most half the tile size
        for cand in range(tb, max(16, tb // 2) - 1, -16):
            if B % cand == 0:
                tb = cand
                break
    return tb


def _pick_chunk(tb, S):
    """In-kernel sublane chunk: bounds live f32 intermediates to ~0.5 MiB each."""
    target = max(8, min(64, (131072 // max(S, 1)) // 8 * 8))
    for c in (64, 32, 16, 8):
        if c <= target and tb % c == 0:
            return c
    return tb


def boundary_focal_loss(inputs, targets, mask=None, *, alpha=0.25, gamma=2.0,
                        boundary_weight=5.0, window_size=3,
                        label_smoothing=0.05):
    """JAX/Pallas equivalent of BoundaryFocalLoss.forward (binary 0/1 targets)."""
    inputs = jnp.asarray(inputs, jnp.float32)
    targets = jnp.asarray(targets)
    if inputs.ndim == 1:                    # 1-D path == single-row 2-D path
        inputs = inputs[None, :]
        targets = targets[None, :]
        if mask is not None:
            mask = jnp.asarray(mask)[None, :]

    B, S = inputs.shape
    has_mask = mask is not None

    # binary targets / mask as bf16 (exact for 0/1) -> half HBM traffic
    targets_bf = targets.astype(jnp.bfloat16)
    mask_bf = jnp.asarray(mask).astype(jnp.bfloat16) if has_mask else None

    tile_budget, vmem_limit = _vmem_plan()
    tb = _pick_tile(B, S, tile_budget)
    cb = _pick_chunk(tb, S)
    nt = pl.cdiv(B, tb)
    ragged = (B % tb) != 0                  # last tile partially valid (no jnp.pad)

    kernel = functools.partial(
        _boundary_focal_kernel,
        alpha=float(alpha), gamma=float(gamma),
        boundary_weight=float(boundary_weight),
        window_size=int(window_size),
        label_smoothing=float(label_smoothing),
        has_mask=has_mask, chunk_rows=int(cb), tile_rows=int(tb),
        batch_rows=int(B), ragged=bool(ragged))

    in_spec = pl.BlockSpec((tb, S), lambda i: (i, 0))
    out_spec = pl.BlockSpec((1, S), lambda i: (i, 0))

    n_out = 2 if has_mask else 1
    cost = pl.CostEstimate(
        flops=int(40 * B * S),
        transcendentals=int(4 * B * S),
        bytes_accessed=int(B * S * (4 + 2 + (2 if has_mask else 0))
                           + 4 * nt * S * n_out))
    cparams = pltpu.CompilerParams(
        dimension_semantics=("parallel",),
        vmem_limit_bytes=int(vmem_limit))

    if has_mask:
        loss_parts, msum_parts = pl.pallas_call(
            kernel,
            grid=(nt,),
            in_specs=[in_spec, in_spec, in_spec],
            out_specs=(out_spec, out_spec),
            out_shape=(jax.ShapeDtypeStruct((nt, S), jnp.float32),
                       jax.ShapeDtypeStruct((nt, S), jnp.float32)),
            compiler_params=cparams,
            cost_estimate=cost,
        )(inputs, targets_bf, mask_bf)
        loss_sum = jnp.sum(loss_parts)
        mask_sum = jnp.sum(msum_parts)
        return jnp.where(mask_sum > 0, loss_sum / mask_sum, jnp.float32(0.0))
    else:
        loss_parts = pl.pallas_call(
            kernel,
            grid=(nt,),
            in_specs=[in_spec, in_spec],
            out_specs=out_spec,
            out_shape=jax.ShapeDtypeStruct((nt, S), jnp.float32),
            compiler_params=cparams,
            cost_estimate=cost,
        )(inputs, targets_bf)
        return jnp.sum(loss_parts) / jnp.float32(B * S)


# ----------------------------------------------------------------------------
# pure-JAX reference (matches the PyTorch module for the 2-D case)
# ----------------------------------------------------------------------------
def _reference_loss(x, t, mask=None, *, alpha=0.25, gamma=2.0,
                    boundary_weight=5.0, window_size=3, label_smoothing=0.05):
    x = x.astype(jnp.float32)
    t = t.astype(jnp.float32)
    S = t.shape[1]
    st = jnp.where(t > 0.5, 1.0 - label_smoothing / 2.0, label_smoothing / 2.0)

    prev = jnp.concatenate([t[:, :1], t[:, :-1]], axis=1)
    diff = (t != prev).astype(jnp.float32)
    diff = diff.at[:, 0].set(0.0)
    idx = jnp.arange(S)[None, :]
    boundaries = jnp.zeros_like(t)
    for k in range(-window_size, window_size + 1):
        rolled = jnp.roll(diff, -k, axis=1)
        valid = (idx + k >= 0) & (idx + k < S)
        boundaries = jnp.maximum(boundaries, jnp.where(valid, rolled, 0.0))

    weights = 1.0 + boundaries * (boundary_weight - 1.0)
    probs = jax.nn.sigmoid(x)
    weights = weights * (1.0 - jnp.abs(probs - 0.5) * 2.0 * 0.5)

    bce = jnp.maximum(x, 0.0) - x * st + jnp.log1p(jnp.exp(-jnp.abs(x)))
    pt = jnp.exp(-bce)
    alpha_w = alpha * (t > 0.5) + (1.0 - alpha) * (t <= 0.5)
    f_loss = alpha_w * (1.0 - pt) ** gamma * bce * weights
    if mask is not None:
        mask = mask.astype(jnp.float32)
        return jnp.where(mask.sum() > 0, (f_loss * mask).sum() / mask.sum(), 0.0)
    return jnp.mean(f_loss)


# TODO(synk): torch.no_grad() on the adaptive factor only affects backprop;
# a training-mode port would need lax.stop_gradient / custom_vjp.

if __name__ == "__main__":
    key = jax.random.PRNGKey(0)
    k1, k2, k3, k4, k5, k6, k7, k8 = jax.random.split(key, 8)

    # mask=None path, tiny batch (single full-dim block, single chunk)
    B, S = 4, 128
    logits = jax.random.normal(k1, (B, S), dtype=jnp.float32)
    targets = jax.random.bernoulli(k2, 0.5, (B, S)).astype(jnp.float32)
    loss = jax.block_until_ready(boundary_focal_loss(logits, targets))
    ref = _reference_loss(logits, targets)
    assert jnp.allclose(loss, ref, rtol=1e-3, atol=1e-6), (float(loss), float(ref))

    # mask path
    mask = jax.random.bernoulli(k3, 0.7, (B, S)).astype(jnp.float32)
    loss_m = jax.block_until_ready(boundary_focal_loss(logits, targets, mask))
    ref_m = _reference_loss(logits, targets, mask)
    assert jnp.allclose(loss_m, ref_m, rtol=1e-3, atol=1e-6), (float(loss_m), float(ref_m))

    # larger batch -> multi-tile grid with a ragged (masked) last tile, no pad
    B2 = 40
    logits2 = jax.random.normal(k4, (B2, S), dtype=jnp.float32)
    targets2 = jax.random.bernoulli(k5, 0.5, (B2, S)).astype(jnp.float32)
    loss2 = jax.block_until_ready(boundary_focal_loss(logits2, targets2))
    ref2 = _reference_loss(logits2, targets2)
    assert jnp.allclose(loss2, ref2, rtol=1e-3, atol=1e-6), (float(loss2), float(ref2))

    # multi-chunk in-kernel loop (tile 48 rows -> 3 chunks of 16) + mask path
    B3 = 96
    logits3 = jax.random.normal(k6, (B3, S), dtype=jnp.float32)
    targets3 = jax.random.bernoulli(k7, 0.5, (B3, S)).astype(jnp.float32)
    mask3 = jax.random.bernoulli(k8, 0.6, (B3, S)).astype(jnp.float32)
    loss3 = jax.block_until_ready(boundary_focal_loss(logits3, targets3, mask3))
    ref3 = _reference_loss(logits3, targets3, mask3)
    assert jnp.allclose(loss3, ref3, rtol=1e-3, atol=1e-6), (float(loss3), float(ref3))

    print("KERNEL_OK")
</pallas_src>

<mosaic_0001>
module attributes {stable_mosaic.version = 11 : i64} {
  func.func @_boundary_focal_kernel(%arg0: i32, %arg1: memref<4x128xf32, #tpu.memory_space<vmem>>, %arg2: memref<4x128xbf16, #tpu.memory_space<vmem>>, %arg3: memref<1x128xf32, #tpu.memory_space<vmem>>) attributes {dimension_semantics = [#tpu.dimension_semantics<parallel>], iteration_bounds = array<i64: 1>, scalar_prefetch = 0 : i64, scratch_operands = 0 : i64, tpu.core_type = #tpu.core_type<tc>, window_params = [{transform_indices = @transform_0, window_bounds = array<i64: 4, 128>}, {transform_indices = @transform_1, window_bounds = array<i64: 4, 128>}, {transform_indices = @transform_2, window_bounds = array<i64: 1, 128>}]} {
    %0 = tpu.iota {dimensions = array<i32: 1>} : vector<1x128xi32>
    %cst = arith.constant 0.000000e+00 : f32
    %1 = vector.broadcast %cst : f32 to vector<1x128xf32>
    %cst_0 = arith.constant 0.949999988 : f32
    %cst_1 = arith.constant 2.500000e-02 : f32
    %cst_2 = arith.constant -5.000000e-01 : f32
    %cst_3 = arith.constant 7.500000e-01 : f32
    %cst_4 = arith.constant 4.000000e+00 : f32
    %c0_i32 = arith.constant 0 : i32
    %c4_i32 = arith.constant 4 : i32
    %2 = arith.muli %c0_i32, %c4_i32 : i32
    %3 = tpu.assume_multiple %2, 4 : i32
    %4 = arith.index_cast %3 : i32 to index
    %c0 = arith.constant 0 : index
    %5 = vector.load %arg1[%4, %c0] : memref<4x128xf32, #tpu.memory_space<vmem>>, vector<4x128xf32>
    %6 = arith.index_cast %3 : i32 to index
    %c0_5 = arith.constant 0 : index
    %7 = vector.load %arg2[%6, %c0_5] : memref<4x128xbf16, #tpu.memory_space<vmem>>, vector<4x128xbf16>
    %8 = arith.extf %7 : vector<4x128xbf16> to vector<4x128xf32>
    %9 = vector.broadcast %cst_0 : f32 to vector<4x128xf32>
    %10 = arith.mulf %8, %9 : vector<4x128xf32>
    %11 = vector.broadcast %cst_1 : f32 to vector<4x128xf32>
    %12 = arith.addf %11, %10 : vector<4x128xf32>
    %13 = vector.broadcast %cst_2 : f32 to vector<4x128xf32>
    %14 = arith.mulf %8, %13 : vector<4x128xf32>
    %15 = vector.broadcast %cst_3 : f32 to vector<4x128xf32>
    %16 = arith.addf %15, %14 : vector<4x128xf32>
    %c1_i32 = arith.constant 1 : i32
    %17 = tpu.dynamic_rotate %8 by %c1_i32 dim 1 : vector<4x128xf32>, i32 -> vector<4x128xf32>
    %18 = arith.cmpf one, %8, %17 : vector<4x128xf32>
    %c1_i32_6 = arith.constant 1 : i32
    %19 = vector.broadcast %c1_i32_6 : i32 to vector<1x128xi32>
    %20 = arith.cmpi sge, %0, %19 : vector<1x128xi32>
    %21 = vector.broadcast %20 : vector<1x128xi1> to vector<4x128xi1>
    %22 = arith.andi %18, %21 : vector<4x128xi1>
    %cst_7 = arith.constant 1.000000e+00 : f32
    %cst_8 = arith.constant 0.000000e+00 : f32
    %23 = vector.broadcast %cst_7 : f32 to vector<4x128xf32>
    %24 = vector.broadcast %cst_8 : f32 to vector<4x128xf32>
    %25 = arith.select %22, %23, %24 : vector<4x128xi1>, vector<4x128xf32>
    %c127_i32 = arith.constant 127 : i32
    %26 = tpu.dynamic_rotate %25 by %c127_i32 dim 1 : vector<4x128xf32>, i32 -> vector<4x128xf32>
    %c127_i32_9 = arith.constant 127 : i32
    %27 = vector.broadcast %c127_i32_9 : i32 to vector<1x128xi32>
    %28 = arith.cmpi slt, %0, %27 : vector<1x128xi32>
    %cst_10 = arith.constant 0.000000e+00 : f32
    %29 = vector.shape_cast %28 : vector<1x128xi1> to vector<1x128xi1>
    %30 = vector.broadcast %29 : vector<1x128xi1> to vector<4x128xi1>
    %31 = vector.broadcast %cst_10 : f32 to vector<4x128xf32>
    %32 = arith.select %30, %26, %31 : vector<4x128xi1>, vector<4x128xf32>
    %33 = arith.maximumf %25, %32 : vector<4x128xf32>
    %c126_i32 = arith.constant 126 : i32
    %34 = tpu.dynamic_rotate %33 by %c126_i32 dim 1 : vector<4x128xf32>, i32 -> vector<4x128xf32>
    %c126_i32_11 = arith.constant 126 : i32
    %35 = vector.broadcast %c126_i32_11 : i32 to vector<1x128xi32>
    %36 = arith.cmpi slt, %0, %35 : vector<1x128xi32>
    %cst_12 = arith.constant 0.000000e+00 : f32
    %37 = vector.shape_cast %36 : vector<1x128xi1> to vector<1x128xi1>
    %38 = vector.broadcast %37 : vector<1x128xi1> to vector<4x128xi1>
    %39 = vector.broadcast %cst_12 : f32 to vector<4x128xf32>
    %40 = arith.select %38, %34, %39 : vector<4x128xi1>, vector<4x128xf32>
    %41 = arith.maximumf %33, %40 : vector<4x128xf32>
    %c1_i32_13 = arith.constant 1 : i32
    %42 = tpu.dynamic_rotate %25 by %c1_i32_13 dim 1 : vector<4x128xf32>, i32 -> vector<4x128xf32>
    %c1_i32_14 = arith.constant 1 : i32
    %43 = vector.broadcast %c1_i32_14 : i32 to vector<1x128xi32>
    %44 = arith.cmpi sge, %0, %43 : vector<1x128xi32>
    %cst_15 = arith.constant 0.000000e+00 : f32
    %45 = vector.shape_cast %44 : vector<1x128xi1> to vector<1x128xi1>
    %46 = vector.broadcast %45 : vector<1x128xi1> to vector<4x128xi1>
    %47 = vector.broadcast %cst_15 : f32 to vector<4x128xf32>
    %48 = arith.select %46, %42, %47 : vector<4x128xi1>, vector<4x128xf32>
    %49 = arith.maximumf %25, %48 : vector<4x128xf32>
    %c2_i32 = arith.constant 2 : i32
    %50 = tpu.dynamic_rotate %49 by %c2_i32 dim 1 : vector<4x128xf32>, i32 -> vector<4x128xf32>
    %c2_i32_16 = arith.constant 2 : i32
    %51 = vector.broadcast %c2_i32_16 : i32 to vector<1x128xi32>
    %52 = arith.cmpi sge, %0, %51 : vector<1x128xi32>
    %cst_17 = arith.constant 0.000000e+00 : f32
    %53 = vector.shape_cast %52 : vector<1x128xi1> to vector<1x128xi1>
    %54 = vector.broadcast %53 : vector<1x128xi1> to vector<4x128xi1>
    %55 = vector.broadcast %cst_17 : f32 to vector<4x128xf32>
    %56 = arith.select %54, %50, %55 : vector<4x128xi1>, vector<4x128xf32>
    %57 = arith.maximumf %49, %56 : vector<4x128xf32>
    %58 = arith.maximumf %41, %57 : vector<4x128xf32>
    %59 = vector.broadcast %cst_4 : f32 to vector<4x128xf32>
    %60 = arith.mulf %58, %59 : vector<4x128xf32>
    %cst_18 = arith.constant 1.000000e+00 : f32
    %61 = vector.broadcast %cst_18 : f32 to vector<4x128xf32>
    %62 = arith.addf %61, %60 : vector<4x128xf32>
    %63 = math.absf %5 : vector<4x128xf32>
    %cst_19 = arith.constant 5.000000e-01 : f32
    %64 = vector.broadcast %cst_19 : f32 to vector<4x128xf32>
    %65 = arith.mulf %64, %63 : vector<4x128xf32>
    %66 = math.tanh %65 : vector<4x128xf32>
    %cst_20 = arith.constant 5.000000e-01 : f32
    %67 = vector.broadcast %cst_20 : f32 to vector<4x128xf32>
    %68 = arith.mulf %67, %66 : vector<4x128xf32>
    %cst_21 = arith.constant 1.000000e+00 : f32
    %69 = vector.broadcast %cst_21 : f32 to vector<4x128xf32>
    %70 = arith.subf %69, %68 : vector<4x128xf32>
    %71 = arith.mulf %62, %70 : vector<4x128xf32>
    %cst_22 = arith.constant 0.000000e+00 : f32
    %72 = vector.broadcast %cst_22 : f32 to vector<4x128xf32>
    %73 = arith.maximumf %5, %72 : vector<4x128xf32>
    %74 = arith.mulf %5, %12 : vector<4x128xf32>
    %cst_23 = arith.constant 0.000000e+00 : f32
    %75 = vector.broadcast %cst_23 : f32 to vector<4x128xf32>
    %76 = arith.subf %75, %63 : vector<4x128xf32>
    %77 = math.exp %76 : vector<4x128xf32>
    %78 = arith.subf %73, %74 : vector<4x128xf32>
    %79 = math.log1p %77 : vector<4x128xf32>
    %80 = arith.addf %78, %79 : vector<4x128xf32>
    %cst_24 = arith.constant 1.000000e+00 : f32
    %81 = vector.broadcast %cst_24 : f32 to vector<4x128xf32>
    %82 = arith.addf %81, %66 : vector<4x128xf32>
    %cst_25 = arith.constant 5.000000e-01 : f32
    %83 = vector.broadcast %cst_25 : f32 to vector<4x128xf32>
    %84 = arith.mulf %83, %82 : vector<4x128xf32>
    %85 = arith.subf %74, %73 : vector<4x128xf32>
    %86 = math.exp %85 : vector<4x128xf32>
    %87 = arith.mulf %86, %84 : vector<4x128xf32>
    %cst_26 = arith.constant 1.000000e+00 : f32
    %88 = vector.broadcast %cst_26 : f32 to vector<4x128xf32>
    %89 = arith.subf %88, %87 : vector<4x128xf32>
    %90 = arith.mulf %89, %89 : vector<4x128xf32>
    %91 = arith.mulf %16, %90 : vector<4x128xf32>
    %92 = arith.mulf %91, %80 : vector<4x128xf32>
    %93 = arith.mulf %92, %71 : vector<4x128xf32>
    %cst_27 = arith.constant dense<0.000000e+00> : vector<128xf32>
    %94 = vector.multi_reduction <add>, %93, %cst_27 [0] : vector<4x128xf32> to vector<128xf32>
    %95 = vector.shape_cast %94 : vector<128xf32> to vector<1x128xf32>
    %96 = arith.addf %1, %95 : vector<1x128xf32>
    %c1_i32_28 = arith.constant 1 : i32
    %c0_29 = arith.constant 0 : index
    %c0_30 = arith.constant 0 : index
    %97 = vector.load %arg3[%c0_29, %c0_30] : memref<1x128xf32, #tpu.memory_space<vmem>>, vector<1x128xf32>
    tpu.vector_store %arg3[%c0_29, %c0_30], %96 {strides = array<i32>} : memref<1x128xf32, #tpu.memory_space<vmem>>, vector<1x128xf32>,
    return
  }
  func.func @transform_0(%arg0: i32) -> (i32, i32) {
    %c0_i32 = arith.constant 0 : i32
    %c0_i32_0 = arith.constant 0 : i32
    return %arg0, %c0_i32 : i32, i32
  }
  func.func @transform_1(%arg0: i32) -> (i32, i32) {
    %c0_i32 = arith.constant 0 : i32
    %c0_i32_0 = arith.constant 0 : i32
    return %arg0, %c0_i32 : i32, i32
  }
  func.func @transform_2(%arg0: i32) -> (i32, i32) {
    %c0_i32 = arith.constant 0 : i32
    %c0_i32_0 = arith.constant 0 : i32
    return %arg0, %c0_i32 : i32, i32
  }
}

</mosaic_0001>

<llo_original>
// kernel: tpu_custom_call.1
$region0: #{tpu_custom_call.1}
  #allocation0 [shape = 'u32[]', space=smem, size = 0x4, offset = 0x4, fixed_abs, tag = 'smem constant byte address 0x4 - core index']
  #allocation1 [shape = 'u32[72,128]{1,0:T(1,128)}', space=vmem, size = 0x9000, scoped, tag = 'internal scratch']
  %s0 = inlined_call_operand.hbm [shape: f32[4,128], index: 0, kind: input, shape index: {}]
  %s1 = inlined_call_operand.hbm [shape: bf16[4,128], index: 1, kind: input, shape index: {}]
  %s2 = inlined_call_operand.hbm [shape: f32[1,128], index: 2, kind: output, shape index: {}]
  %s3 = sld [smem:[#allocation0]]
  $region26: #{tpu_custom_call.1} parent=0
    _
  %s5 = ssub.s32 1, %s3
  %s6 = scalar_select 0, %s5, %s3
  $region1: #{tpu_custom_call.1} parent=0
    #allocation2 [shape = 'u8[2048]{0}', space=vmem, size = 0x800, scoped, tag = 'input window, operand 0, single buffered']
    #allocation3 [shape = 's32[1]{0}', space=sflag, size = 0x4, scoped, tag = 'scoped memory for tpu_custom_call.1']
    #allocation4 [shape = 's32[1]{0}', space=sflag, size = 0x4, scoped, tag = 'scoped memory for tpu_custom_call.1']
    #allocation5 [shape = 'u8[1024]{0}', space=vmem, size = 0x400, scoped, tag = 'input window, operand 1, single buffered']
    #allocation6 [shape = 's32[1]{0}', space=sflag, size = 0x4, scoped, tag = 'scoped memory for tpu_custom_call.1']
    #allocation7 [shape = 'u8[512]{0}', space=vmem, size = 0x400, scoped, tag = 'output window, operand 0, single buffered']
    %7 = vsyncpa [#allocation3], 0
    %8 = vsyncpa [#allocation6], 0
    %9 = vsyncpa [#allocation4], 0
    // Predicated region
    $region2: #{tpu_custom_call.1} parent=1 // pred_check
      _
    $region3: #{tpu_custom_call.1} parent=1 // pred_check_branch
      %11 = sbr.rel (0) target = $region5
    $region4: #{tpu_custom_call.1} parent=1 // pred_region
      %13 = vsyncadd [#allocation3], 0
      %s15 = sshll.u32 %s0, 4
      %s16 = int_to_ptr.hbm [resolvable:$true] %s15
      %s17 = sshll.u32 [#allocation2], 4
      %s18 = int_to_ptr.vmem [resolvable:$true] %s17
      %20 = dma.hbm_to_vmem [thread:$0]  %s16, 64, %s18, [#allocation3]
    $region5: #{tpu_custom_call.1} parent=1 // pred_fallthru
      _
    // Predicated region
    $region6: #{tpu_custom_call.1} parent=1 // pred_check
      _
    $region7: #{tpu_custom_call.1} parent=1 // pred_check_branch
      %22 = sbr.rel (0) target = $region9
    $region8: #{tpu_custom_call.1} parent=1 // pred_region
      %24 = vsyncadd [#allocation6], 0
      %s26 = sshll.u32 %s1, 4
      %s27 = int_to_ptr.hbm [resolvable:$true] %s26
      %s28 = sshll.u32 [#allocation5], 4
      %s29 = int_to_ptr.vmem [resolvable:$true] %s28
      %31 = dma.hbm_to_vmem [thread:$0]  %s27, 32, %s29, [#allocation6]
    $region9: #{tpu_custom_call.1} parent=1 // pred_fallthru
      _
    // Predicated region
    $region10: #{tpu_custom_call.1} parent=1 // pred_check
      _
    $region11: #{tpu_custom_call.1} parent=1 // pred_check_branch
      %33 = sbr.rel (0) target = $region13
    $region12: #{tpu_custom_call.1} parent=1 // pred_region
      %35 = dma.done [#allocation3], 64
    $region13: #{tpu_custom_call.1} parent=1 // pred_fallthru
      _
    // Predicated region
    $region14: #{tpu_custom_call.1} parent=1 // pred_check
      _
    $region15: #{tpu_custom_call.1} parent=1 // pred_check_branch
      %37 = sbr.rel (0) target = $region17
    $region16: #{tpu_custom_call.1} parent=1 // pred_region
      %39 = dma.done [#allocation6], 32
    $region17: #{tpu_custom_call.1} parent=1 // pred_fallthru
      _
    %v40 = vlaneseq
    %v41 = vand.u32 %v40, 127
    %v42 = vld [vmem:[#allocation2] sm:$0xf]
    %v43 = vld [vmem:[#allocation5] sm:$0x3]
    %v44 = vunpack.c.l.bf16 %v43
    %v45 = vmul.f32 %v44, 0.95
    %v46 = vadd.f32 %v45, 0.025
    %v47 = vmul.f32 %v44, -0.5
    %v48 = vadd.f32 %v47, 0.75
    %49 = vrot.lane.b32.xlu0 %v44, 1
    %v50 = vpop.permute.xlu0 %49
    %vm51 = vcmp.ne.f32.partialorder %v44, %v50
    %vm52 = vcmp.ge.s32.totalorder %v41, 1
    %v53 = vsel %vm52, 1, 0
    %vm54 = vcmp.eq.s32.totalorder %v53, 1
    %vm55 = vmand %vm51, %vm54
    %v56 = vsel %vm55, 1.0, 0.0
    %57 = vrot.lane.b32.xlu0 %v56, 127
    %v58 = vpop.permute.xlu0 %57
    %vm59 = vcmp.lt.s32.totalorder %v41, 127
    %v60 = vsel %vm59, 1, 0
    %vm61 = vcmp.eq.s32.totalorder %v60, 1
    %v62 = vsel %vm61, %v58, 0.0
    %v63 = vmax.f32 %v56, %v62
    %64 = vrot.lane.b32.xlu0 %v63, 126
    %v65 = vpop.permute.xlu0 %64
    %vm66 = vcmp.lt.s32.totalorder %v41, 126
    %v67 = vsel %vm66, 1, 0
    %vm68 = vcmp.eq.s32.totalorder %v67, 1
    %v69 = vsel %vm68, %v65, 0.0
    %v70 = vmax.f32 %v63, %v69
    %71 = vrot.lane.b32.xlu0 %v56, 1
    %v72 = vpop.permute.xlu0 %71
    %v73 = vsel %vm54, %v72, 0.0
    %v74 = vmax.f32 %v56, %v73
    %75 = vrot.lane.b32.xlu0 %v74, 2
    %v76 = vpop.permute.xlu0 %75
    %vm77 = vcmp.ge.s32.totalorder %v41, 2
    %v78 = vsel %vm77, 1, 0
    %vm79 = vcmp.eq.s32.totalorder %v78, 1
    %v80 = vsel %vm79, %v76, 0.0
    %v81 = vmax.f32 %v74, %v80
    %v82 = vmax.f32 %v70, %v81
    %v83 = vmul.f32 %v82, 4.0
    %v84 = vadd.f32 %v83, 1.0
    %v85 = vand.u32 2147483647, %v42
    %v86 = vmul.f32 %v85, 0.5
    %v87 = vtanh.pop %v86
    %v88 = vmul.f32 %v87, 0.5
    %v89 = vsub.f32 1.0, %v88
    %v90 = vmul.f32 %v84, %v89
    %v91 = vmax.f32 %v42, 0.0
    %v92 = vmul.f32 %v42, %v46
    %v93 = vsub.f32 0.0, %v85
    %v94 = vmul.f32 %v93, 1.442695
    %v95 = vpow.pop %v94
    %v96 = vsub.f32 %v91, %v92
    %v97 = vadd.f32 %v95, 1.0
    %v98 = vlog2.pop %v97
    %v99 = vmul.f32 %v98, 0.6931472
    %v100 = vmul.f32 -0.5, %v95
    %v101 = vadd.f32 %v100, 1.0
    %v102 = vmul.f32 %v101, %v95
    %v103 = vand.u32 2147483647, %v95
    %vm104 = vcmp.lt.f32.partialorder %v103, 0.0004427343
    %v105 = vsel %vm104, %v102, %v99
    %v106 = vadd.f32 %v96, %v105
    %v107 = vadd.f32 %v87, 1.0
    %v108 = vmul.f32 %v107, 0.5
    %v109 = vsub.f32 %v92, %v91
    %v110 = vmul.f32 %v109, 1.442695
    %v111 = vpow.pop %v110
    %v112 = vmul.f32 %v111, %v108
    %v113 = vsub.f32 1.0, %v112
    %v114 = vmul.f32 %v113, %v113
    %v115 = vmul.f32 %v48, %v114
    %v116 = vmul.f32 %v115, %v106
    %v117 = vmul.f32 %v116, %v90
    %vm118 = vcmask 1043456
    %v119 = vsel %vm118, %v117, 0.0
    %v120 = vrot.slane %v119, 4
    %v121 = vadd.f32 %v119, %v120
    %v122 = vrot.slane %v121, 2
    %v123 = vadd.f32 %v121, %v122
    %v124 = vrot.slane %v123, 1
    %v125 = vadd.f32 %v123, %v124
    %v126 = vadd.f32 %v125, 0.0
    %127 = vst [vmem:[#allocation7] sm:$0x1] %v126
    // Predicated region
    $region18: #{tpu_custom_call.1} parent=1 // pred_check
      _
    $region19: #{tpu_custom_call.1} parent=1 // pred_check_branch
      %129 = sbr.rel (0) target = $region21
    $region20: #{tpu_custom_call.1} parent=1 // pred_region
      %131 = vsyncadd [#allocation4], 0
      %s133 = sshll.u32 [#allocation7], 4
      %s134 = int_to_ptr.vmem [resolvable:$true] %s133
      %s135 = sshll.u32 %s2, 4
      %s136 = int_to_ptr.hbm [resolvable:$true] %s135
      %138 = dma.vmem_to_hbm [thread:$0]  %s134, 16, %s136, [#allocation4]
    $region21: #{tpu_custom_call.1} parent=1 // pred_fallthru
      _
    // Predicated region
    $region22: #{tpu_custom_call.1} parent=1 // pred_check
      _
    $region23: #{tpu_custom_call.1} parent=1 // pred_check_branch
      %140 = sbr.rel (0) target = $region25
    $region24: #{tpu_custom_call.1} parent=1 // pred_region
      %142 = dma.done [#allocation4], 16
    $region25: #{tpu_custom_call.1} parent=1 // pred_fallthru
      _
    %143 = vsyncpa [#allocation3], 1
    %144 = vsyncpa [#allocation6], 1
    %145 = vsyncpa [#allocation4], 1

</llo_original>
